<compile_context>
chip_gen: v5e
topology: v5e:2x2
jax: 0.10.0
libtpu: 0.0.40
codegen_flags: <defaults>
</compile_context>

<pallas_src>
import jax
import jax.numpy as jnp
from jax import lax
from jax.experimental import pallas as pl
from jax.experimental.pallas import tpu as pltpu

_LANE = 128
_SUBLANE = 8
_UNROLL_THRESHOLD = 32  # fully unroll channel loops in Python below this C


def _make_kernel(C):
    def kernel(x_ref, w_ref, b_ref, o_ref):
        # x_ref, o_ref: (1, C, T, 128) VMEM tiles (one batch elem, one spatial tile)
        # w_ref: (C,) f32 SMEM  -- Conv2d(C, 1, 1) weight
        # b_ref: (1,) f32 SMEM  -- Conv2d bias
        t_rows, lanes = x_ref.shape[2], x_ref.shape[3]

        # 1x1 conv over channels: accumulate (T,128) slabs in f32, scalar
        # weights splat from SMEM. No full-tile f32 temporary.
        def add_channel(c, acc):
            return acc + x_ref[0, c].astype(jnp.float32) * w_ref[c]

        init = jnp.full((t_rows, lanes), b_ref[0], dtype=jnp.float32)
        if C <= _UNROLL_THRESHOLD:
            logits = init
            for c in range(C):
                logits = add_channel(c, logits)
        else:
            logits = lax.fori_loop(0, C, add_channel, init, unroll=8)

        att = jax.nn.sigmoid(logits).astype(o_ref.dtype)  # (T, 128)

        # Gate every channel with the same attention map, native dtype.
        def gate_channel(c, carry):
            o_ref[0, c] = x_ref[0, c] * att
            return carry

        if C <= _UNROLL_THRESHOLD:
            for c in range(C):
                gate_channel(c, 0)
        else:
            lax.fori_loop(0, C, gate_channel, 0, unroll=8)

    return kernel


def self_attention(x_nchw, w, b, *, min_total_steps=8):
    """x_nchw: (B, C, H, W); w: (C,) = Conv2d(C,1,1) weight flattened; b: (1,)."""
    B, C, H, W = x_nchw.shape
    HW = H * W
    dtype = x_nchw.dtype
    itemsize = jnp.dtype(dtype).itemsize

    # --- Generation-aware VMEM budgets (v5e/v6e: 128 MiB, v7x: 64 MiB/core). ---
    try:
        vmem_cap = int(pltpu.get_tpu_info().vmem_capacity_bytes)
    except Exception:
        vmem_cap = 64 * 1024 * 1024  # conservative fallback (v7x per-core)
    vmem_limit = min((vmem_cap * 3) // 4, 96 * 1024 * 1024)  # 96 MiB / 48 MiB
    tile_budget = vmem_limit // 2                            # headroom for buffers + temps

    # --- Spatial layout: lane-dense (B, C, n_rows, 128). ---
    ragged = (HW % _LANE) != 0
    if ragged:
        # TODO(synk): ragged HW (HW % 128 != 0) uses a pad+slice fallback that
        # costs one extra HBM round trip; an in-kernel masked tail would remove it.
        hw_pad = pl.cdiv(HW, _LANE) * _LANE
        x = jnp.pad(x_nchw.reshape(B, C, HW), ((0, 0), (0, 0), (0, hw_pad - HW)))
    else:
        hw_pad = HW
        x = x_nchw.reshape(B, C, HW)  # pure reshape, no copy

    n_rows = hw_pad // _LANE
    x = x.reshape(B, C, n_rows, _LANE)

    # --- Spatial tile size (in 128-lane rows). ---
    if n_rows <= _SUBLANE:
        t_rows = n_rows  # full-extent block is legal even if not a multiple of 8
    else:
        # 2(in)+2(out) double buffers per row + f32 accumulator/att temporaries.
        per_row_bytes = 4 * C * _LANE * itemsize + 2 * _LANE * 4
        rows_budget = max(_SUBLANE,
                          (tile_budget // per_row_bytes) // _SUBLANE * _SUBLANE)
        tiles_for_budget = pl.cdiv(n_rows, rows_budget)
        # Keep >= min_total_steps grid steps when possible (v7x dual-TC + pipelining).
        tiles_for_steps = min(pl.cdiv(min_total_steps, B), pl.cdiv(n_rows, _SUBLANE))
        num_tiles = max(tiles_for_budget, tiles_for_steps, 1)
        t_rows = pl.cdiv(pl.cdiv(n_rows, num_tiles), _SUBLANE) * _SUBLANE

    grid = (B, pl.cdiv(n_rows, t_rows))

    w_smem = w.reshape(C).astype(jnp.float32)
    b_smem = b.reshape(1).astype(jnp.float32)

    out = pl.pallas_call(
        _make_kernel(C),
        out_shape=jax.ShapeDtypeStruct((B, C, n_rows, _LANE), dtype),
        grid=grid,
        in_specs=[
            pl.BlockSpec((1, C, t_rows, _LANE), lambda bi, si: (bi, 0, si, 0)),
            pl.BlockSpec(memory_space=pltpu.MemorySpace.SMEM),
            pl.BlockSpec(memory_space=pltpu.MemorySpace.SMEM),
        ],
        out_specs=pl.BlockSpec((1, C, t_rows, _LANE), lambda bi, si: (bi, 0, si, 0)),
        compiler_params=pltpu.CompilerParams(
            dimension_semantics=("parallel", "parallel"),
            vmem_limit_bytes=vmem_limit,
        ),
        cost_estimate=pl.CostEstimate(
            flops=3 * B * C * hw_pad,           # conv mul+add + gating mul
            transcendentals=B * hw_pad,         # sigmoid
            bytes_accessed=2 * B * C * hw_pad * itemsize,
        ),
    )(x, w_smem, b_smem)

    out = out.reshape(B, C, hw_pad)
    if ragged:
        out = out[:, :, :HW]
    return out.reshape(B, C, H, W)


if __name__ == "__main__":
    B, C, H, W = 2, 4, 16, 16

    key = jax.random.PRNGKey(0)
    kx, kw, kb = jax.random.split(key, 3)

    # Conv2d(C, 1, kernel_size=1): weight (1, C, 1, 1) -> (C,), bias (1,).
    x = jax.random.normal(kx, (B, C, H, W), dtype=jnp.float32)
    w = jax.random.normal(kw, (C,), dtype=jnp.float32) * 0.1
    b = jax.random.normal(kb, (1,), dtype=jnp.float32) * 0.1

    out = jax.block_until_ready(self_attention(x, w, b))

    # Pure-JAX reference.
    logits = jnp.einsum("bchw,c->bhw", x, w) + b[0]
    ref = x * jax.nn.sigmoid(logits)[:, None, :, :]
    assert out.shape == (B, C, H, W)
    assert jnp.allclose(out, ref, atol=1e-5, rtol=1e-5)

    print("KERNEL_OK")
</pallas_src>

<mosaic_0001>
module attributes {stable_mosaic.version = 11 : i64} {
  func.func @kernel(%arg0: i32, %arg1: i32, %arg2: memref<1x4x2x128xf32, #tpu.memory_space<vmem>>, %arg3: memref<4xf32, #tpu.memory_space<smem>>, %arg4: memref<1xf32, #tpu.memory_space<smem>>, %arg5: memref<1x4x2x128xf32, #tpu.memory_space<vmem>>) attributes {dimension_semantics = [#tpu.dimension_semantics<parallel>, #tpu.dimension_semantics<parallel>], iteration_bounds = array<i64: 2, 1>, scalar_prefetch = 0 : i64, scratch_operands = 0 : i64, tpu.core_type = #tpu.core_type<tc>, window_params = [{transform_indices = @transform_0, window_bounds = array<i64: 1, 4, 2, 128>}, {transform_indices = @transform_1, window_bounds = array<i64: 4>}, {transform_indices = @transform_2, window_bounds = array<i64: 1>}, {transform_indices = @transform_3, window_bounds = array<i64: 1, 4, 2, 128>}]} {
    %c0 = arith.constant 0 : index
    %0 = memref.load %arg4[%c0] : memref<1xf32, #tpu.memory_space<smem>>
    %1 = vector.broadcast %0 : f32 to vector<2x128xf32>
    %c0_0 = arith.constant 0 : index
    %c0_1 = arith.constant 0 : index
    %c0_2 = arith.constant 0 : index
    %c0_3 = arith.constant 0 : index
    %2 = vector.load %arg2[%c0_0, %c0_1, %c0_2, %c0_3] : memref<1x4x2x128xf32, #tpu.memory_space<vmem>>, vector<1x1x2x128xf32>
    %3 = vector.shape_cast %2 : vector<1x1x2x128xf32> to vector<2x128xf32>
    %c0_4 = arith.constant 0 : index
    %4 = memref.load %arg3[%c0_4] : memref<4xf32, #tpu.memory_space<smem>>
    %5 = vector.broadcast %4 : f32 to vector<2x128xf32>
    %6 = arith.mulf %3, %5 : vector<2x128xf32>
    %7 = arith.addf %1, %6 : vector<2x128xf32>
    %c0_5 = arith.constant 0 : index
    %c1 = arith.constant 1 : index
    %c0_6 = arith.constant 0 : index
    %c0_7 = arith.constant 0 : index
    %8 = vector.load %arg2[%c0_5, %c1, %c0_6, %c0_7] : memref<1x4x2x128xf32, #tpu.memory_space<vmem>>, vector<1x1x2x128xf32>
    %9 = vector.shape_cast %8 : vector<1x1x2x128xf32> to vector<2x128xf32>
    %c1_8 = arith.constant 1 : index
    %10 = memref.load %arg3[%c1_8] : memref<4xf32, #tpu.memory_space<smem>>
    %11 = vector.broadcast %10 : f32 to vector<2x128xf32>
    %12 = arith.mulf %9, %11 : vector<2x128xf32>
    %13 = arith.addf %7, %12 : vector<2x128xf32>
    %c0_9 = arith.constant 0 : index
    %c2 = arith.constant 2 : index
    %c0_10 = arith.constant 0 : index
    %c0_11 = arith.constant 0 : index
    %14 = vector.load %arg2[%c0_9, %c2, %c0_10, %c0_11] : memref<1x4x2x128xf32, #tpu.memory_space<vmem>>, vector<1x1x2x128xf32>
    %15 = vector.shape_cast %14 : vector<1x1x2x128xf32> to vector<2x128xf32>
    %c2_12 = arith.constant 2 : index
    %16 = memref.load %arg3[%c2_12] : memref<4xf32, #tpu.memory_space<smem>>
    %17 = vector.broadcast %16 : f32 to vector<2x128xf32>
    %18 = arith.mulf %15, %17 : vector<2x128xf32>
    %19 = arith.addf %13, %18 : vector<2x128xf32>
    %c0_13 = arith.constant 0 : index
    %c3 = arith.constant 3 : index
    %c0_14 = arith.constant 0 : index
    %c0_15 = arith.constant 0 : index
    %20 = vector.load %arg2[%c0_13, %c3, %c0_14, %c0_15] : memref<1x4x2x128xf32, #tpu.memory_space<vmem>>, vector<1x1x2x128xf32>
    %21 = vector.shape_cast %20 : vector<1x1x2x128xf32> to vector<2x128xf32>
    %c3_16 = arith.constant 3 : index
    %22 = memref.load %arg3[%c3_16] : memref<4xf32, #tpu.memory_space<smem>>
    %23 = vector.broadcast %22 : f32 to vector<2x128xf32>
    %24 = arith.mulf %21, %23 : vector<2x128xf32>
    %25 = arith.addf %19, %24 : vector<2x128xf32>
    %26 = arith.negf %25 : vector<2x128xf32>
    %27 = math.exp %26 : vector<2x128xf32>
    %cst = arith.constant 1.000000e+00 : f32
    %28 = vector.broadcast %cst : f32 to vector<2x128xf32>
    %29 = arith.addf %28, %27 : vector<2x128xf32>
    %30 = arith.divf %28, %29 : vector<2x128xf32>
    %c0_17 = arith.constant 0 : index
    %c0_18 = arith.constant 0 : index
    %c0_19 = arith.constant 0 : index
    %c0_20 = arith.constant 0 : index
    %31 = vector.load %arg2[%c0_17, %c0_18, %c0_19, %c0_20] : memref<1x4x2x128xf32, #tpu.memory_space<vmem>>, vector<1x1x2x128xf32>
    %32 = vector.shape_cast %31 : vector<1x1x2x128xf32> to vector<2x128xf32>
    %33 = arith.mulf %32, %30 : vector<2x128xf32>
    %c0_21 = arith.constant 0 : index
    %c0_22 = arith.constant 0 : index
    %c0_23 = arith.constant 0 : index
    %c0_24 = arith.constant 0 : index
    %34 = vector.load %arg5[%c0_21, %c0_22, %c0_23, %c0_24] : memref<1x4x2x128xf32, #tpu.memory_space<vmem>>, vector<1x1x2x128xf32>
    %35 = vector.shape_cast %34 : vector<1x1x2x128xf32> to vector<2x128xf32>
    %36 = vector.shape_cast %33 : vector<2x128xf32> to vector<1x1x2x128xf32>
    tpu.vector_store %arg5[%c0_21, %c0_22, %c0_23, %c0_24], %36 {strides = array<i32>} : memref<1x4x2x128xf32, #tpu.memory_space<vmem>>, vector<1x1x2x128xf32>,
    %c0_25 = arith.constant 0 : index
    %c1_26 = arith.constant 1 : index
    %c0_27 = arith.constant 0 : index
    %c0_28 = arith.constant 0 : index
    %37 = vector.load %arg2[%c0_25, %c1_26, %c0_27, %c0_28] : memref<1x4x2x128xf32, #tpu.memory_space<vmem>>, vector<1x1x2x128xf32>
    %38 = vector.shape_cast %37 : vector<1x1x2x128xf32> to vector<2x128xf32>
    %39 = arith.mulf %38, %30 : vector<2x128xf32>
    %c0_29 = arith.constant 0 : index
    %c1_30 = arith.constant 1 : index
    %c0_31 = arith.constant 0 : index
    %c0_32 = arith.constant 0 : index
    %40 = vector.load %arg5[%c0_29, %c1_30, %c0_31, %c0_32] : memref<1x4x2x128xf32, #tpu.memory_space<vmem>>, vector<1x1x2x128xf32>
    %41 = vector.shape_cast %40 : vector<1x1x2x128xf32> to vector<2x128xf32>
    %42 = vector.shape_cast %39 : vector<2x128xf32> to vector<1x1x2x128xf32>
    tpu.vector_store %arg5[%c0_29, %c1_30, %c0_31, %c0_32], %42 {strides = array<i32>} : memref<1x4x2x128xf32, #tpu.memory_space<vmem>>, vector<1x1x2x128xf32>,
    %c0_33 = arith.constant 0 : index
    %c2_34 = arith.constant 2 : index
    %c0_35 = arith.constant 0 : index
    %c0_36 = arith.constant 0 : index
    %43 = vector.load %arg2[%c0_33, %c2_34, %c0_35, %c0_36] : memref<1x4x2x128xf32, #tpu.memory_space<vmem>>, vector<1x1x2x128xf32>
    %44 = vector.shape_cast %43 : vector<1x1x2x128xf32> to vector<2x128xf32>
    %45 = arith.mulf %44, %30 : vector<2x128xf32>
    %c0_37 = arith.constant 0 : index
    %c2_38 = arith.constant 2 : index
    %c0_39 = arith.constant 0 : index
    %c0_40 = arith.constant 0 : index
    %46 = vector.load %arg5[%c0_37, %c2_38, %c0_39, %c0_40] : memref<1x4x2x128xf32, #tpu.memory_space<vmem>>, vector<1x1x2x128xf32>
    %47 = vector.shape_cast %46 : vector<1x1x2x128xf32> to vector<2x128xf32>
    %48 = vector.shape_cast %45 : vector<2x128xf32> to vector<1x1x2x128xf32>
    tpu.vector_store %arg5[%c0_37, %c2_38, %c0_39, %c0_40], %48 {strides = array<i32>} : memref<1x4x2x128xf32, #tpu.memory_space<vmem>>, vector<1x1x2x128xf32>,
    %c0_41 = arith.constant 0 : index
    %c3_42 = arith.constant 3 : index
    %c0_43 = arith.constant 0 : index
    %c0_44 = arith.constant 0 : index
    %49 = vector.load %arg2[%c0_41, %c3_42, %c0_43, %c0_44] : memref<1x4x2x128xf32, #tpu.memory_space<vmem>>, vector<1x1x2x128xf32>
    %50 = vector.shape_cast %49 : vector<1x1x2x128xf32> to vector<2x128xf32>
    %51 = arith.mulf %50, %30 : vector<2x128xf32>
    %c0_45 = arith.constant 0 : index
    %c3_46 = arith.constant 3 : index
    %c0_47 = arith.constant 0 : index
    %c0_48 = arith.constant 0 : index
    %52 = vector.load %arg5[%c0_45, %c3_46, %c0_47, %c0_48] : memref<1x4x2x128xf32, #tpu.memory_space<vmem>>, vector<1x1x2x128xf32>
    %53 = vector.shape_cast %52 : vector<1x1x2x128xf32> to vector<2x128xf32>
    %54 = vector.shape_cast %51 : vector<2x128xf32> to vector<1x1x2x128xf32>
    tpu.vector_store %arg5[%c0_45, %c3_46, %c0_47, %c0_48], %54 {strides = array<i32>} : memref<1x4x2x128xf32, #tpu.memory_space<vmem>>, vector<1x1x2x128xf32>,
    return
  }
  func.func @transform_0(%arg0: i32, %arg1: i32) -> (i32, i32, i32, i32) {
    %c0_i32 = arith.constant 0 : i32
    %c0_i32_0 = arith.constant 0 : i32
    %c0_i32_1 = arith.constant 0 : i32
    return %arg0, %c0_i32, %arg1, %c0_i32_0 : i32, i32, i32, i32
  }
  func.func @transform_1(%arg0: i32, %arg1: i32) -> i32 {
    %c0_i32 = arith.constant 0 : i32
    %c0_i32_0 = arith.constant 0 : i32
    return %c0_i32 : i32
  }
  func.func @transform_2(%arg0: i32, %arg1: i32) -> i32 {
    %c0_i32 = arith.constant 0 : i32
    %c0_i32_0 = arith.constant 0 : i32
    return %c0_i32 : i32
  }
  func.func @transform_3(%arg0: i32, %arg1: i32) -> (i32, i32, i32, i32) {
    %c0_i32 = arith.constant 0 : i32
    %c0_i32_0 = arith.constant 0 : i32
    %c0_i32_1 = arith.constant 0 : i32
    return %arg0, %c0_i32, %arg1, %c0_i32_0 : i32, i32, i32, i32
  }
}

</mosaic_0001>

<llo_original>
// kernel: tpu_custom_call.1
$region0: #{tpu_custom_call.1}
  #allocation0 [shape = 'u32[]', space=smem, size = 0x4, offset = 0x4, fixed_abs, tag = 'smem constant byte address 0x4 - core index']
  #allocation1 [shape = 'u32[72,128]{1,0:T(1,128)}', space=vmem, size = 0x9000, scoped, tag = 'internal scratch']
  #allocation2 [shape = 'f32[1]{0:T(128)S(6)}', space=smem, size = 0x200, scoped, tag = 'scoped memory for tpu_custom_call.1']
  %s0 = inlined_call_operand.hbm [shape: f32[2,4,2,128], index: 0, kind: input, shape index: {}]
  %s1 = inlined_call_operand.vmem [shape: f32[4], index: 1, kind: input, shape index: {}]
  %s2 = inlined_call_operand.<no memory space> [shape: f32[1], index: 2, kind: input, shape index: {}]
  %s3 = inlined_call_operand.hbm [shape: f32[2,4,2,128], index: 3, kind: output, shape index: {}]
  %s4 = sld [smem:[#allocation0]]
  $region53: #{tpu_custom_call.1} parent=0
    _
  %s6 = ssub.s32 1, %s4
  %s7 = scalar_select 0, %s6, %s4
  %8 = sst [smem:[#allocation2]] %s2
  $region1: #{tpu_custom_call.1} parent=0
    #allocation3 [shape = 'u8[8192]{0}', space=vmem, size = 0x2000, scoped, tag = 'input window, operand 0']
    #allocation4 [shape = 's32[2]{0}', space=sflag, size = 0x8, scoped, tag = 'scoped memory for tpu_custom_call.1']
    #allocation5 [shape = 's32[2]{0}', space=sflag, size = 0x8, scoped, tag = 'scoped memory for tpu_custom_call.1']
    #allocation6 [shape = 's32[2]{0}', space=sflag, size = 0x8, scoped, tag = 'scoped memory for tpu_custom_call.1']
    #allocation7 [shape = 'u8[512]{0}', space=smem, size = 0x200, scoped, tag = 'input window, operand 1, single buffered']
    #allocation8 [shape = 'u8[8192]{0}', space=vmem, size = 0x2000, scoped, tag = 'output window, operand 0']
    %9 = vsyncpa [#allocation4], 0
    %s10 = scalar_lea.sflag [#allocation4], 1
    %11 = vsyncpa %s10, 0
    %12 = vsyncpa [#allocation6], 0
    %13 = vsyncpa [#allocation5], 0
    %s14 = scalar_lea.sflag [#allocation5], 1
    %15 = vsyncpa %s14, 0
    loop: start=0, step=1, limit=4
    $region2: #{tpu_custom_call.1} parent=1 // loop_pre_header
      _
    $region3: #{tpu_custom_call.1} parent=1 // loop_header
      %s17 = sphi 0, %s21
      %p18 = scmp.ge.s32.totalorder %s17, 4
      %s24 = sphi 0, %s36
      %s25 = sphi 0, %s32
      %s26 = sphi 0, %s24
      %s27 = sphi 0, %s25
      %s28 = sphi 0, %s26
      %s29 = sphi 0, %s27
      %s41 = sphi 0, %s43
      %s44 = sphi 0, %s41
      %s45 = sphi 0, %s44
      %s61 = sphi 0, %s45
      %s65 = sphi 0, %s65
      %s67 = sphi 0, %s65
      %s68 = sphi 0, %s67
      %s82 = sphi 0, %s68
      %s86 = sphi 0, %s86
      %s88 = sphi 0, %s86
      %s89 = sphi 0, %s88
      %s103 = sphi 0, %s89
      %s111 = sphi 0, %s113
      %s114 = sphi 0, %s111
      %s115 = sphi 0, %s114
      %s131 = sphi 0, %s115
    $region4: #{tpu_custom_call.1} parent=1 // loop_header_branch
      %20 = sbr.rel (%p18) target = $region8
    $region5: #{tpu_custom_call.1} parent=1 // loop_body
      %s22 = ssub.s32 %s17, 1
      %s23 = ssub.s32 %s17, 2
      %s30 = sadd.s32 1, %s25
      %p31 = scmp.ge.s32.totalorder %s30, 1
      %s32 = scalar_select %p31, 0, %s30
      %s33 = sadd.s32 1, %s24
      %s34 = scalar_select %p31, %s33, %s24
      %p35 = scmp.ge.s32.totalorder %s34, 2
      %s36 = scalar_select %p35, 0, %s34
      %s37 = ssub.s32 %s24, %s36
      %s38 = ssub.s32 %s25, %s32
      %s39 = sor.u32 %s37, %s38
      %p40 = scmp.eq.s32.totalorder %s39, 0
      %s42 = sadd.s32 %s41, 1
      %s43 = scalar_select %p40, %s41, %s42
      %p46 = pneg %p40
      %p47 = scmp.eq.s32.totalorder %s17, 1
      %p48 = por %p46, %p47
      %p49 = scmp.ne.s32.totalorder %s41, %s44
      %p50 = scmp.eq.s32.totalorder %s17, 0
      %p51 = por %p49, %p50
      %p52 = scmp.ne.s32.totalorder %s41, %s44
      %p53 = scmp.eq.s32.totalorder %s22, 1
      %p54 = por %p52, %p53
      %p55 = scmp.ne.s32.totalorder %s44, %s45
      %p56 = scmp.eq.s32.totalorder %s22, 0
      %p57 = por %p55, %p56
      %p58 = scmp.ne.s32.totalorder %s44, %s45
      %p59 = scmp.eq.s32.totalorder %s23, 1
      %p60 = por %p58, %p59
      %p62 = scmp.ne.s32.totalorder %s45, %s61
      %p63 = scmp.eq.s32.totalorder %s23, 0
      %p64 = por %p62, %p63
      %s66 = sadd.s32 %s65, 1
      %p69 = scmp.eq.s32.totalorder %s17, 1
      %p70 = scmp.ne.s32.totalorder %s65, %s67
      %p71 = scmp.eq.s32.totalorder %s17, 0
      %p72 = por %p70, %p71
      %p73 = scmp.ne.s32.totalorder %s65, %s67
      %p74 = scmp.eq.s32.totalorder %s22, 1
      %p75 = por %p73, %p74
      %p76 = scmp.ne.s32.totalorder %s67, %s68
      %p77 = scmp.eq.s32.totalorder %s22, 0
      %p78 = por %p76, %p77
      %p79 = scmp.ne.s32.totalorder %s67, %s68
      %p80 = scmp.eq.s32.totalorder %s23, 1
      %p81 = por %p79, %p80
      %p83 = scmp.ne.s32.totalorder %s68, %s82
      %p84 = scmp.eq.s32.totalorder %s23, 0
      %p85 = por %p83, %p84
      %s87 = sadd.s32 %s86, 1
      %p90 = scmp.eq.s32.totalorder %s17, 1
      %p91 = scmp.ne.s32.totalorder %s86, %s88
      %p92 = scmp.eq.s32.totalorder %s17, 0
      %p93 = por %p91, %p92
      %p94 = scmp.ne.s32.totalorder %s86, %s88
      %p95 = scmp.eq.s32.totalorder %s22, 1
      %p96 = por %p94, %p95
      %p97 = scmp.ne.s32.totalorder %s88, %s89
      %p98 = scmp.eq.s32.totalorder %s22, 0
      %p99 = por %p97, %p98
      %p100 = scmp.ne.s32.totalorder %s88, %s89
      %p101 = scmp.eq.s32.totalorder %s23, 1
      %p102 = por %p100, %p101
      %p104 = scmp.ne.s32.totalorder %s89, %s103
      %p105 = scmp.eq.s32.totalorder %s23, 0
      %p106 = por %p104, %p105
      %s107 = ssub.s32 %s24, %s36
      %s108 = ssub.s32 %s25, %s32
      %s109 = sor.u32 %s107, %s108
      %p110 = scmp.eq.s32.totalorder %s109, 0
      %s112 = sadd.s32 %s111, 1
      %s113 = scalar_select %p110, %s111, %s112
      %p116 = pneg %p110
      %p117 = scmp.eq.s32.totalorder %s17, 1
      %p118 = por %p116, %p117
      %p119 = scmp.ne.s32.totalorder %s111, %s114
      %p120 = scmp.eq.s32.totalorder %s17, 0
      %p121 = por %p119, %p120
      %p122 = scmp.ne.s32.totalorder %s111, %s114
      %p123 = scmp.eq.s32.totalorder %s22, 1
      %p124 = por %p122, %p123
      %p125 = scmp.ne.s32.totalorder %s114, %s115
      %p126 = scmp.eq.s32.totalorder %s22, 0
      %p127 = por %p125, %p126
      %p128 = scmp.ne.s32.totalorder %s114, %s115
      %p129 = scmp.eq.s32.totalorder %s23, 1
      %p130 = por %p128, %p129
      %p132 = scmp.ne.s32.totalorder %s115, %s131
      %p133 = scmp.eq.s32.totalorder %s23, 0
      %p134 = por %p132, %p133
      %p135 = scmp.le.s32.totalorder 1, %s17
      %p136 = scmp.lt.s32.totalorder %s17, 3
      %p137 = pnand %p135, %p136
      %p138 = pneg %p137
      // Predicated region
      $region9: #{tpu_custom_call.1} parent=5 // pred_check
        _
      $region10: #{tpu_custom_call.1} parent=5 // pred_check_branch
        %140 = sbr.rel (%p137) target = $region12
      $region11: #{tpu_custom_call.1} parent=5 // pred_region
        %s141 = ssub.s32 %s17, 1
        // Predicated region
        $region13: #{tpu_custom_call.1} parent=11 // pred_check
          %p142 = pneg %p78
        $region14: #{tpu_custom_call.1} parent=11 // pred_check_branch
          %144 = sbr.rel (%p142) target = $region16
        $region15: #{tpu_custom_call.1} parent=11 // pred_region
          %146 = vsyncadd [#allocation6], 0
          %s148 = sshll.u32 %s1, 4
          %s149 = int_to_ptr.vmem [resolvable:$true] %s148
          %151 = dma.vmem_to_smem %s149, 16, [#allocation7], [#allocation6]
        $region16: #{tpu_custom_call.1} parent=11 // pred_fallthru
          _
        // Predicated region
        $region17: #{tpu_custom_call.1} parent=11 // pred_check
          %p152 = pneg %p99
        $region18: #{tpu_custom_call.1} parent=11 // pred_check_branch
          %154 = sbr.rel (%p152) target = $region20
        $region19: #{tpu_custom_call.1} parent=11 // pred_region
          _
        $region20: #{tpu_custom_call.1} parent=11 // pred_fallthru
          _
      $region12: #{tpu_custom_call.1} parent=5 // pred_fallthru
        _
      %p155 = scmp.lt.s32.totalorder %s17, 2
      // Predicated region
      $region21: #{tpu_custom_call.1} parent=5 // pred_check
        %p156 = pneg %p155
      $region22: #{tpu_custom_call.1} parent=5 // pred_check_branch
        %158 = sbr.rel (%p156) target = $region24
      $region23: #{tpu_custom_call.1} parent=5 // pred_region
        // Predicated region
        $region25: #{tpu_custom_call.1} parent=23 // pred_check
          %p159 = pneg %p51
        $region26: #{tpu_custom_call.1} parent=23 // pred_check_branch
          %161 = sbr.rel (%p159) target = $region28
        $region27: #{tpu_custom_call.1} parent=23 // pred_region
          %s162 = sand.u32 %s41, 1
          %s163 = scalar_lea.sflag [#allocation4], %s162
          %s164 = sand.u32 %s41, 1
          %s165 = smul.addr %s164, 8
          %s166 = scalar_lea.vmem [#allocation3], %s165
          %168 = vsyncadd %s163, 0
          %s169 = smul.addr %s24, 4
          %s170 = sadd.s32 %s25, %s169
          %s171 = smul.addr %s170, 2
          %s172 = scalar_lea.hbm %s0, %s171
          %s173 = sshll.u32 %s172, 4
          %s174 = int_to_ptr.hbm [resolvable:$true] %s173
          %s175 = sshll.u32 %s166, 4
          %s176 = int_to_ptr.vmem [resolvable:$true] %s175
          %181 = dma.hbm_to_vmem [thread:$0]  %s174, 128, %s176, %s163, 32, 32, 2
        $region28: #{tpu_custom_call.1} parent=23 // pred_fallthru
          _
      $region24: #{tpu_custom_call.1} parent=5 // pred_fallthru
        _
      %p182 = scmp.le.s32.totalorder 1, %s17
      %p183 = scmp.lt.s32.totalorder %s17, 3
      %p184 = pnand %p182, %p183
      %p185 = pneg %p184
      // Predicated region
      $region29: #{tpu_custom_call.1} parent=5 // pred_check
        _
      $region30: #{tpu_custom_call.1} parent=5 // pred_check_branch
        %187 = sbr.rel (%p184) target = $region32
      $region31: #{tpu_custom_call.1} parent=5 // pred_region
        %s188 = ssub.s32 %s17, 1
        %s189 = sand.u32 %s44, 1
        %s190 = scalar_lea.sflag [#allocation4], %s189
        %s191 = sand.u32 %s44, 1
        %s192 = smul.addr %s191, 8
        %s193 = scalar_lea.vmem [#allocation3], %s192
        // Predicated region
        $region33: #{tpu_custom_call.1} parent=31 // pred_check
          %p194 = pneg %p57
        $region34: #{tpu_custom_call.1} parent=31 // pred_check_branch
          %196 = sbr.rel (%p194) target = $region36
        $region35: #{tpu_custom_call.1} parent=31 // pred_region
          %198 = dma.done %s190, 128
        $region36: #{tpu_custom_call.1} parent=31 // pred_fallthru
          _
        // Predicated region
        $region37: #{tpu_custom_call.1} parent=31 // pred_check
          %p199 = pneg %p78
        $region38: #{tpu_custom_call.1} parent=31 // pred_check_branch
          %201 = sbr.rel (%p199) target = $region40
        $region39: #{tpu_custom_call.1} parent=31 // pred_region
          %203 = dma.done [#allocation6], 16
        $region40: #{tpu_custom_call.1} parent=31 // pred_fallthru
          _
        %204 = sfence
        %s205 = sand.u32 %s44, 1
        %s206 = scalar_lea.sflag [#allocation4], %s205
        %s207 = sand.u32 %s44, 1
        %s208 = smul.addr %s207, 8
        %s209 = scalar_lea.vmem [#allocation3], %s208
        %p210 = pneg %p57
        %p211 = pneg %p54
        %p212 = pneg %p78
        %p213 = pneg %p75
        %p214 = pneg %p99
        %p215 = pneg %p96
        %p216 = pneg %p127
        %p217 = pneg %p124
        %s218 = sand.u32 %s114, 1
        %s219 = scalar_lea.sflag [#allocation5], %s218
        %s220 = sand.u32 %s114, 1
        %s221 = smul.addr %s220, 8
        %s222 = scalar_lea.vmem [#allocation8], %s221
        %s223 = sld [smem:[#allocation2]]
        %v224 = vstv %s223
        %v225 = vld [vmem:[%s193] sm:$0x3]
        %s226 = sld [smem:[#allocation7]]
        %v227 = vstv %s226
        %v228 = vmul.f32 %v225, %v227
        %v229 = vadd.f32 %v224, %v228
        %s230 = scalar_lea.vmem %s193, 2 [#allocation3]
        %v231 = vld [vmem:[%s230] sm:$0x3]
        %s232 = sld [smem:[#allocation7 + $0x1]]
        %v233 = vstv %s232
        %v234 = vmul.f32 %v231, %v233
        %v235 = vadd.f32 %v229, %v234
        %s236 = scalar_lea.vmem %s193, 4 [#allocation3]
        %v237 = vld [vmem:[%s236] sm:$0x3]
        %s238 = sld [smem:[#allocation7 + $0x2]]
        %v239 = vstv %s238
        %v240 = vmul.f32 %v237, %v239
        %v241 = vadd.f32 %v235, %v240
        %s242 = scalar_lea.vmem %s193, 6 [#allocation3]
        %v243 = vld [vmem:[%s242] sm:$0x3]
        %s244 = sld [smem:[#allocation7 + $0x3]]
        %v245 = vstv %s244
        %v246 = vmul.f32 %v243, %v245
        %v247 = vadd.f32 %v241, %v246
        %v248 = vxor.u32 %v247, 2147483648
        %v249 = vmul.f32 %v248, 1.442695
        %v250 = vpow.pop %v249
        %v251 = vadd.f32 %v250, 1.0
        %v252 = vrcp.pop %v251
        %v253 = vmul.f32 %v251, %v252
        %v254 = vsub.f32 1.0, %v253
        %v255 = vmul.f32 %v252, %v254
        %v256 = vadd.f32 %v252, %v255
        %vm257 = vweird.f32 %v251
        %vm258 = vweird.f32 %v252
        %vm259 = vmor %vm257, %vm258
        %v260 = vsel %vm259, %v252, %v256
        %v261 = vand.u32 2147483647, %v251
        %vm262 = vcmp.eq.f32.partialorder %v261, 8.507059e+37
        %v263 = vand.u32 %v251, 2147483648
        %v264 = vor.u32 1.1754944e-38, %v263
        %v265 = vsel %vm262, %v264, %v260
        %v266 = vmul.f32 1.0, %v265
        %v267 = vmul.f32 %v225, %v266
        %268 = vst [vmem:[%s222] sm:$0x3] %v267
        %v269 = vld [vmem:[%s230] sm:$0x3]
        %v270 = vmul.f32 %v269, %v266
        %s271 = scalar_lea.vmem %s222, 2 [#allocation8]
        %272 = vst [vmem:[%s271] sm:$0x3] %v270
        %v273 = vld [vmem:[%s236] sm:$0x3]
        %v274 = vmul.f32 %v273, %v266
        %s275 = scalar_lea.vmem %s222, 4 [#allocation8]
        %276 = vst [vmem:[%s275] sm:$0x3] %v274
        %v277 = vld [vmem:[%s242] sm:$0x3]
        %v278 = vmul.f32 %v277, %v266
        %s279 = scalar_lea.vmem %s222, 6 [#allocation8]
        %280 = vst [vmem:[%s279] sm:$0x3] %v278
        %s281 = sand.u32 %s114, 1
        %s282 = scalar_lea.sflag [#allocation5], %s281
        %s283 = sand.u32 %s114, 1
        %s284 = smul.addr %s283, 8
        %s285 = scalar_lea.vmem [#allocation8], %s284
        // Predicated region
        $region41: #{tpu_custom_call.1} parent=31 // pred_check
          %p286 = pneg %p124
        $region42: #{tpu_custom_call.1} parent=31 // pred_check_branch
          %288 = sbr.rel (%p286) target = $region44
        $region43: #{tpu_custom_call.1} parent=31 // pred_region
          %290 = vsyncadd %s282, 0
          %s291 = smul.addr %s26, 4
          %s292 = sadd.s32 %s27, %s291
          %s293 = smul.addr %s292, 2
          %s294 = scalar_lea.hbm %s3, %s293
          %s295 = sshll.u32 %s285, 4
          %s296 = int_to_ptr.vmem [resolvable:$true] %s295
          %s297 = sshll.u32 %s294, 4
          %s298 = int_to_ptr.hbm [resolvable:$true] %s297
          %303 = dma.vmem_to_hbm [thread:$0]  %s296, 128, %s298, %s282, 32, 32, 2
        $region44: #{tpu_custom_call.1} parent=31 // pred_fallthru
          _
      $region32: #{tpu_custom_call.1} parent=5 // pred_fallthru
        _
      %p304 = scmp.le.s32.totalorder 2, %s17
      // Predicated region
      $region45: #{tpu_custom_call.1} parent=5 // pred_check
        %p305 = pneg %p304
      $region46: #{tpu_custom_call.1} parent=5 // pred_check_branch
        %307 = sbr.rel (%p305) target = $region48
      $region47: #{tpu_custom_call.1} parent=5 // pred_region
        %s308 = ssub.s32 %s17, 2
        // Predicated region
        $region49: #{tpu_custom_call.1} parent=47 // pred_check
          %p309 = pneg %p130
        $region50: #{tpu_custom_call.1} parent=47 // pred_check_branch
          %311 = sbr.rel (%p309) target = $region52
        $region51: #{tpu_custom_call.1} parent=47 // pred_region
          %s312 = sand.u32 %s115, 1
          %s313 = scalar_lea.sflag [#allocation5], %s312
          %s314 = sand.u32 %s115, 1
          %s315 = smul.addr %s314, 8
          %s316 = scalar_lea.vmem [#allocation8], %s315
          %318 = dma.done %s313, 128
        $region52: #{tpu_custom_call.1} parent=47 // pred_fallthru
          _
      $region48: #{tpu_custom_call.1} parent=5 // pred_fallthru
        _
    $region6: #{tpu_custom_call.1} parent=1 // loop_footer
      %s21 = sadd.s32 1, %s17
    $region7: #{tpu_custom_call.1} parent=1 // loop_footer_branch
      %16 = sbr.rel target = $region3
    $region8: #{tpu_custom_call.1} parent=1 // loop_exit
      _
    %319 = vsyncpa [#allocation4], 1
    %s320 = scalar_lea.sflag [#allocation4], 1
    %321 = vsyncpa %s320, 1
    %322 = vsyncpa [#allocation5], 1
    %s323 = scalar_lea.sflag [#allocation5], 1
    %324 = vsyncpa %s323, 1
    %325 = vsyncpa [#allocation6], 1
    %s326 = scalar_lea.sflag [#allocation6], 1
    %327 = vsyncpa %s326, 1

</llo_original>
